<compile_context>
chip_gen: v7x
topology: tpu7x:2x2x1
jax: 0.10.0
libtpu: 0.0.40
codegen_flags: <defaults>
</compile_context>

<pallas_src>
import jax
import jax.numpy as jnp
from jax.experimental import pallas as pl
from jax.experimental.pallas import tpu as pltpu


# ----------------------------------------------------------------------------- kernel
def feedforward_kernel(x_ref, gamma_ref, beta_ref,
                       wa_ref, wb_ref, ba_ref, bb_ref,
                       wdn_ref, bdn_ref,
                       o_ref,
                       xn_scratch, acc_scratch):
    # grid = (token_tiles, hidden_tiles); hidden axis is the reduction (innermost).
    k = pl.program_id(1)

    @pl.when(k == 0)
    def _():
        # LayerNorm over last dim (eps = 1e-5, PyTorch default), once per token tile.
        x = x_ref[...].astype(jnp.float32)
        mean = jnp.mean(x, axis=-1, keepdims=True)
        cen = x - mean
        var = jnp.mean(cen * cen, axis=-1, keepdims=True)
        xn = cen * jax.lax.rsqrt(var + 1e-5)
        xn = xn * gamma_ref[...] + beta_ref[...]
        xn_scratch[...] = xn.astype(xn_scratch.dtype)          # bf16 for the MXU

    xn = xn_scratch[...]                                        # (TM, dim) bf16

    # up projection, split into value/gate halves (bf16 in, f32 accumulate)
    a = jnp.dot(xn, wa_ref[...], preferred_element_type=jnp.float32) + ba_ref[...]
    b = jnp.dot(xn, wb_ref[...], preferred_element_type=jnp.float32) + bb_ref[...]

    # gate: a * silu(b)   (drop_1 is identity in eval mode)
    gated = a * (b * jax.nn.sigmoid(b))

    # down projection (K-tiled over hidden), f32 accumulation
    contrib = jnp.dot(gated.astype(wdn_ref.dtype), wdn_ref[...],
                      preferred_element_type=jnp.float32)

    @pl.when(k == 0)
    def _():
        acc_scratch[...] = contrib          # first step: write, no zero-fill/RMW

    @pl.when(k > 0)
    def _():
        acc_scratch[...] += contrib

    @pl.when(k == pl.num_programs(1) - 1)
    def _():
        # drop_2: identity (eval mode)
        o_ref[...] = (acc_scratch[...] + bdn_ref[...]).astype(o_ref.dtype)


# ----------------------------------------------------------------------------- helpers
def _round_up(v, m):
    return (v + m - 1) // m * m


def _device_defaults():
    """Per-TPU-generation tiling & VMEM-limit defaults (weight-streaming roofline)."""
    kind = ""
    try:
        kind = jax.devices()[0].device_kind.lower()
    except Exception:
        pass
    mib = 1024 * 1024
    if "v7" in kind or "7x" in kind:
        # 2 TCs/chip, 64 MiB VMEM per TC: smaller hidden tile, moderate token tile.
        return {"tile_m_f32": 384, "tile_m_bf16": 512, "tile_h": 256,
                "vmem": 56 * mib, "cores": 2}
    if "v6" in kind:
        # 128 MiB VMEM, ~1.35 TB/s HBM, 918 TF/s: need tm >~ 700 to be MXU-bound.
        return {"tile_m_f32": 768, "tile_m_bf16": 1024, "tile_h": 512,
                "vmem": 110 * mib, "cores": 1}
    if "v5e" in kind or ("v5" in kind and "lite" in kind):
        # 197 TF/s / 0.82 TB/s -> roofline crossover near tm=240; VMEM is plentiful.
        return {"tile_m_f32": 256, "tile_m_bf16": 256, "tile_h": 512,
                "vmem": 100 * mib, "cores": 1}
    # Unknown generation: conservative tiles, leave the scoped-VMEM limit alone.
    return {"tile_m_f32": 256, "tile_m_bf16": 512, "tile_h": 512,
            "vmem": None, "cores": 1}


# -------------------------------------------------------------------- weight preparation
def prepare_ffn_params(gamma, beta, w_up, b_up, w_down, b_down, *, tile_h=None):
    """One-time weight preprocessing -- hoist OUT of the per-step hot path.

    Splits W_up into value/gate halves, zero-pads hidden and output dims, casts the
    matmul weights to bf16.  Returns a dict consumed by feedforward_prepared().
    """
    dim = int(w_up.shape[0])
    H = int(w_down.shape[0])
    assert w_up.shape == (dim, 2 * H)
    assert w_down.shape[1] == dim

    dflt = _device_defaults()
    if tile_h is None:
        tile_h = dflt["tile_h"]
    if H <= tile_h:
        th = H
    else:
        assert tile_h % 128 == 0
        th = tile_h
    h_pad = _round_up(H, th)
    d_pad = _round_up(dim, 128)            # lane-dense output writeback

    # split W_up into value / gate halves (matches .chunk(2, dim=-1))
    w_a = w_up[:, :H]
    w_b = w_up[:, H:]
    b_a = b_up[:H].reshape(1, H).astype(jnp.float32)
    b_b = b_up[H:].reshape(1, H).astype(jnp.float32)
    w_dn = w_down
    b_dn = b_down.reshape(1, dim).astype(jnp.float32)

    # zero-padded hidden columns contribute exactly 0 (a=b=0 -> gated=0, W_down rows 0)
    if h_pad != H:
        w_a = jnp.pad(w_a, ((0, 0), (0, h_pad - H)))
        w_b = jnp.pad(w_b, ((0, 0), (0, h_pad - H)))
        b_a = jnp.pad(b_a, ((0, 0), (0, h_pad - H)))
        b_b = jnp.pad(b_b, ((0, 0), (0, h_pad - H)))
        w_dn = jnp.pad(w_dn, ((0, h_pad - H), (0, 0)))
    # zero-padded output columns produce exactly 0 and are sliced off by the wrapper
    if d_pad != dim:
        w_dn = jnp.pad(w_dn, ((0, 0), (0, d_pad - dim)))
        b_dn = jnp.pad(b_dn, ((0, 0), (0, d_pad - dim)))

    return {
        "dim": dim, "hidden": H, "th": th, "h_pad": h_pad, "d_pad": d_pad,
        "gamma": gamma.reshape(1, dim).astype(jnp.float32),
        "beta": beta.reshape(1, dim).astype(jnp.float32),
        "w_a": w_a.astype(jnp.bfloat16),
        "w_b": w_b.astype(jnp.bfloat16),
        "b_a": b_a, "b_b": b_b,
        "w_dn": w_dn.astype(jnp.bfloat16),
        "b_dn": b_dn,
    }


# ----------------------------------------------------------------------------- forward
def feedforward_prepared(x, params, *, tile_m=None, out_dtype=None,
                         vmem_limit_bytes=None):
    """FeedForward forward pass (eval mode) with pre-prepared weights.

    x: [..., dim].  Output dtype defaults to x.dtype (pass bf16 for less DMA/VMEM).
    """
    dim = params["dim"]
    th, h_pad, d_pad = params["th"], params["h_pad"], params["d_pad"]

    lead = x.shape[:-1]
    assert x.shape[-1] == dim
    N = 1
    for s in lead:
        N *= int(s)
    if out_dtype is None:
        out_dtype = x.dtype

    dflt = _device_defaults()
    if vmem_limit_bytes is None:
        vmem_limit_bytes = dflt["vmem"]
    if tile_m is None:
        tile_m = (dflt["tile_m_bf16"] if x.dtype == jnp.bfloat16
                  else dflt["tile_m_f32"])
    assert tile_m % 8 == 0

    x2 = x.reshape(N, dim)

    # ---- token tiling ----
    if N <= tile_m:
        tm = max(16, _round_up(N, 16))          # >=16 rows for bf16 sublane packing
        if dflt["cores"] >= 2 and N >= 256:
            # v7x: split the single tile so both TensorCores get work on the
            # "parallel" token axis.
            tm = max(16, _round_up((N + 1) // 2, 128))
    else:
        tm = tile_m
    n_pad = _round_up(N, tm)
    if n_pad != N:
        # Padded zero rows do NOT produce zero LN output (x=0 -> xn=beta), so garbage
        # flows through the matmuls in those rows -- they are sliced off below.
        x2 = jnp.pad(x2, ((0, n_pad - N), (0, 0)))

    grid = (n_pad // tm, h_pad // th)

    out2 = pl.pallas_call(
        feedforward_kernel,
        out_shape=jax.ShapeDtypeStruct((n_pad, d_pad), out_dtype),
        grid_spec=pltpu.PrefetchScalarGridSpec(
            num_scalar_prefetch=0,
            grid=grid,
            in_specs=[
                pl.BlockSpec((tm, dim), lambda i, k: (i, 0)),    # x tile
                pl.BlockSpec((1, dim), lambda i, k: (0, 0)),     # gamma
                pl.BlockSpec((1, dim), lambda i, k: (0, 0)),     # beta
                pl.BlockSpec((dim, th), lambda i, k: (0, k)),    # W_a (value half)
                pl.BlockSpec((dim, th), lambda i, k: (0, k)),    # W_b (gate half)
                pl.BlockSpec((1, th), lambda i, k: (0, k)),      # b_a
                pl.BlockSpec((1, th), lambda i, k: (0, k)),      # b_b
                pl.BlockSpec((th, d_pad), lambda i, k: (k, 0)),  # W_down
                pl.BlockSpec((1, d_pad), lambda i, k: (0, 0)),   # b_down
            ],
            out_specs=pl.BlockSpec((tm, d_pad), lambda i, k: (i, 0)),
            scratch_shapes=[
                pltpu.VMEM((tm, dim), jnp.bfloat16),    # LayerNorm output (reused over k)
                pltpu.VMEM((tm, d_pad), jnp.float32),   # down-proj accumulator
            ],
        ),
        compiler_params=pltpu.CompilerParams(
            dimension_semantics=("parallel", "arbitrary"),
            vmem_limit_bytes=vmem_limit_bytes),
    )(x2, params["gamma"], params["beta"], params["w_a"], params["w_b"],
      params["b_a"], params["b_b"], params["w_dn"], params["b_dn"])

    return out2[:N, :dim].reshape(*lead, dim)


def feedforward(x, gamma, beta, w_up, b_up, w_down, b_down, *,
                tile_m=None, tile_h=None, out_dtype=None, vmem_limit_bytes=None):
    """Convenience wrapper: prepares weights then runs the kernel.

    For real inference, call prepare_ffn_params() ONCE at model-load time and call
    feedforward_prepared() in the hot path (the per-call split/pad/bf16-cast below
    otherwise adds ~1.5x extra weight HBM traffic per step).
    """
    params = prepare_ffn_params(gamma, beta, w_up, b_up, w_down, b_down,
                                tile_h=tile_h)
    return feedforward_prepared(x, params, tile_m=tile_m, out_dtype=out_dtype,
                                vmem_limit_bytes=vmem_limit_bytes)


# ----------------------------------------------------------------------------- reference
def reference(x, gamma, beta, w_up, b_up, w_down, b_down):
    mean = jnp.mean(x, axis=-1, keepdims=True)
    var = jnp.mean((x - mean) ** 2, axis=-1, keepdims=True)
    xn = (x - mean) / jnp.sqrt(var + 1e-5) * gamma + beta
    up = xn @ w_up + b_up
    h = up.shape[-1] // 2
    a, b = up[..., :h], up[..., h:]
    g = a * (b * jax.nn.sigmoid(b))
    return g @ w_down + b_down


if __name__ == "__main__":
    key = jax.random.PRNGKey(0)

    def make_inputs(key, B, S, dim, hidden):
        kx, ku, kbu, kd, kbd = jax.random.split(key, 5)
        x = jax.random.normal(kx, (B, S, dim), dtype=jnp.float32)
        # LayerNorm params: PyTorch init -> weight=1, bias=0
        gamma = jnp.ones((dim,), jnp.float32)
        beta = jnp.zeros((dim,), jnp.float32)
        # up: nn.Linear(dim, 2*hidden); stored here as (in, out)
        w_up = jax.random.normal(ku, (dim, 2 * hidden), jnp.float32) * 0.05
        b_up = jax.random.normal(kbu, (2 * hidden,), jnp.float32) * 0.05
        # down: nn.Linear(hidden, dim).  NOTE: the original module zero-inits this
        # layer (zero_init), which would make the forward output identically zero.
        # We use random weights so the kernel is non-trivially exercised; forward
        # semantics do not depend on init values.
        w_down = jax.random.normal(kd, (hidden, dim), jnp.float32) * 0.05
        b_down = jax.random.normal(kbd, (dim,), jnp.float32) * 0.05
        return x, gamma, beta, w_up, b_up, w_down, b_down

    # --- test 1: small shapes consistent with the module (single grid tile) ---
    k1, k2 = jax.random.split(key)
    args1 = make_inputs(k1, 2, 8, 32, 64)
    out = jax.block_until_ready(feedforward(*args1))
    ref = reference(*args1)
    assert out.shape == args1[0].shape
    # bf16 matmul operands with f32 accumulation -> loosened tolerance vs f32 reference
    assert jnp.allclose(out, ref, atol=2e-2, rtol=2e-2), "mismatch vs reference (test 1)"

    # --- test 2: exercise token tiling (with padding), hidden K-tiling and the
    #     f32 accumulator / output-dim padding paths (still small shapes) ---
    args2 = make_inputs(k2, 2, 23, 32, 256)
    out2 = jax.block_until_ready(feedforward(*args2, tile_m=16, tile_h=128))
    ref2 = reference(*args2)
    assert out2.shape == args2[0].shape
    assert jnp.allclose(out2, ref2, atol=2e-2, rtol=2e-2), "mismatch vs reference (test 2)"

    print("KERNEL_OK")
</pallas_src>

<mosaic_0001>
module attributes {stable_mosaic.version = 11 : i64} {
  func.func @feedforward_kernel(%arg0: i32, %arg1: i32, %arg2: memref<16x32xf32, #tpu.memory_space<vmem>>, %arg3: memref<1x32xf32, #tpu.memory_space<vmem>>, %arg4: memref<1x32xf32, #tpu.memory_space<vmem>>, %arg5: memref<32x64xbf16, #tpu.memory_space<vmem>>, %arg6: memref<32x64xbf16, #tpu.memory_space<vmem>>, %arg7: memref<1x64xf32, #tpu.memory_space<vmem>>, %arg8: memref<1x64xf32, #tpu.memory_space<vmem>>, %arg9: memref<64x128xbf16, #tpu.memory_space<vmem>>, %arg10: memref<1x128xf32, #tpu.memory_space<vmem>>, %arg11: memref<16x128xf32, #tpu.memory_space<vmem>>, %arg12: memref<16x32xbf16, #tpu.memory_space<vmem>>, %arg13: memref<16x128xf32, #tpu.memory_space<vmem>>) attributes {dimension_semantics = [#tpu.dimension_semantics<parallel>, #tpu.dimension_semantics<arbitrary>], iteration_bounds = array<i64: 1, 1>, scalar_prefetch = 0 : i64, scratch_operands = 2 : i64, tpu.core_type = #tpu.core_type<tc>, window_params = [{transform_indices = @transform_0, window_bounds = array<i64: 16, 32>}, {pipeline_mode = #tpu.pipeline_mode<synchronous>, transform_indices = @transform_1, window_bounds = array<i64: 1, 32>}, {pipeline_mode = #tpu.pipeline_mode<synchronous>, transform_indices = @transform_2, window_bounds = array<i64: 1, 32>}, {transform_indices = @transform_3, window_bounds = array<i64: 32, 64>}, {transform_indices = @transform_4, window_bounds = array<i64: 32, 64>}, {transform_indices = @transform_5, window_bounds = array<i64: 1, 64>}, {transform_indices = @transform_6, window_bounds = array<i64: 1, 64>}, {transform_indices = @transform_7, window_bounds = array<i64: 64, 128>}, {pipeline_mode = #tpu.pipeline_mode<synchronous>, transform_indices = @transform_8, window_bounds = array<i64: 1, 128>}, {transform_indices = @transform_9, window_bounds = array<i64: 16, 128>}]} {
    %c0_i32 = arith.constant 0 : i32
    %0 = arith.cmpi eq, %arg1, %c0_i32 : i32
    %1 = arith.extui %0 : i1 to i32
    %c0_i32_0 = arith.constant 0 : i32
    %2 = arith.cmpi ne, %1, %c0_i32_0 : i32
    scf.if %2 {
      %c0_21 = arith.constant 0 : index
      %c0_22 = arith.constant 0 : index
      %33 = vector.load %arg2[%c0_21, %c0_22] : memref<16x32xf32, #tpu.memory_space<vmem>>, vector<16x32xf32>
      %cst_23 = arith.constant dense<0.000000e+00> : vector<16xf32>
      %34 = vector.multi_reduction <add>, %33, %cst_23 [1] : vector<16x32xf32> to vector<16xf32>
      %35 = vector.shape_cast %34 : vector<16xf32> to vector<16x1xf32>
      %cst_24 = arith.constant 3.200000e+01 : f32
      %36 = vector.broadcast %cst_24 : f32 to vector<16x1xf32>
      %37 = arith.divf %35, %36 : vector<16x1xf32>
      %38 = vector.broadcast %37 : vector<16x1xf32> to vector<16x32xf32>
      %39 = arith.subf %33, %38 : vector<16x32xf32>
      %40 = arith.mulf %39, %39 : vector<16x32xf32>
      %cst_25 = arith.constant dense<0.000000e+00> : vector<16xf32>
      %41 = vector.multi_reduction <add>, %40, %cst_25 [1] : vector<16x32xf32> to vector<16xf32>
      %42 = vector.shape_cast %41 : vector<16xf32> to vector<16x1xf32>
      %cst_26 = arith.constant 3.200000e+01 : f32
      %43 = vector.broadcast %cst_26 : f32 to vector<16x1xf32>
      %44 = arith.divf %42, %43 : vector<16x1xf32>
      %cst_27 = arith.constant 9.99999974E-6 : f32
      %45 = vector.broadcast %cst_27 : f32 to vector<16x1xf32>
      %46 = arith.addf %44, %45 : vector<16x1xf32>
      %47 = math.rsqrt %46 : vector<16x1xf32>
      %48 = vector.broadcast %47 : vector<16x1xf32> to vector<16x32xf32>
      %49 = arith.mulf %39, %48 : vector<16x32xf32>
      %c0_28 = arith.constant 0 : index
      %c0_29 = arith.constant 0 : index
      %50 = vector.load %arg3[%c0_28, %c0_29] : memref<1x32xf32, #tpu.memory_space<vmem>>, vector<1x32xf32>
      %51 = vector.broadcast %50 : vector<1x32xf32> to vector<16x32xf32>
      %52 = arith.mulf %49, %51 : vector<16x32xf32>
      %c0_30 = arith.constant 0 : index
      %c0_31 = arith.constant 0 : index
      %53 = vector.load %arg4[%c0_30, %c0_31] : memref<1x32xf32, #tpu.memory_space<vmem>>, vector<1x32xf32>
      %54 = vector.broadcast %53 : vector<1x32xf32> to vector<16x32xf32>
      %55 = arith.addf %52, %54 : vector<16x32xf32>
      %56 = arith.truncf %55 : vector<16x32xf32> to vector<16x32xbf16>
      %c0_32 = arith.constant 0 : index
      %c0_33 = arith.constant 0 : index
      %57 = vector.load %arg12[%c0_32, %c0_33] : memref<16x32xbf16, #tpu.memory_space<vmem>>, vector<16x32xbf16>
      tpu.vector_store %arg12[%c0_32, %c0_33], %56 {strides = array<i32>} : memref<16x32xbf16, #tpu.memory_space<vmem>>, vector<16x32xbf16>,
    } else {
    }
    %c0 = arith.constant 0 : index
    %c0_1 = arith.constant 0 : index
    %3 = vector.load %arg12[%c0, %c0_1] : memref<16x32xbf16, #tpu.memory_space<vmem>>, vector<16x32xbf16>
    %c0_2 = arith.constant 0 : index
    %c0_3 = arith.constant 0 : index
    %4 = vector.load %arg5[%c0_2, %c0_3] : memref<32x64xbf16, #tpu.memory_space<vmem>>, vector<32x64xbf16>
    %cst = arith.constant dense<0.000000e+00> : vector<16x64xf32>
    %5 = tpu.matmul %3, %4, %cst {dimension_numbers = #tpu.dot_dimension_numbers<[1], [0], [0], [1], [0, 0, 1, 1], [], []>} : vector<16x32xbf16>, vector<32x64xbf16>, vector<16x64xf32> -> vector<16x64xf32>
    %c0_4 = arith.constant 0 : index
    %c0_5 = arith.constant 0 : index
    %6 = vector.load %arg7[%c0_4, %c0_5] : memref<1x64xf32, #tpu.memory_space<vmem>>, vector<1x64xf32>
    %7 = vector.broadcast %6 : vector<1x64xf32> to vector<16x64xf32>
    %8 = arith.addf %5, %7 : vector<16x64xf32>
    %c0_6 = arith.constant 0 : index
    %c0_7 = arith.constant 0 : index
    %9 = vector.load %arg6[%c0_6, %c0_7] : memref<32x64xbf16, #tpu.memory_space<vmem>>, vector<32x64xbf16>
    %cst_8 = arith.constant dense<0.000000e+00> : vector<16x64xf32>
    %10 = tpu.matmul %3, %9, %cst_8 {dimension_numbers = #tpu.dot_dimension_numbers<[1], [0], [0], [1], [0, 0, 1, 1], [], []>} : vector<16x32xbf16>, vector<32x64xbf16>, vector<16x64xf32> -> vector<16x64xf32>
    %c0_9 = arith.constant 0 : index
    %c0_10 = arith.constant 0 : index
    %11 = vector.load %arg8[%c0_9, %c0_10] : memref<1x64xf32, #tpu.memory_space<vmem>>, vector<1x64xf32>
    %12 = vector.broadcast %11 : vector<1x64xf32> to vector<16x64xf32>
    %13 = arith.addf %10, %12 : vector<16x64xf32>
    %14 = arith.negf %13 : vector<16x64xf32>
    %15 = math.exp %14 : vector<16x64xf32>
    %cst_11 = arith.constant 1.000000e+00 : f32
    %16 = vector.broadcast %cst_11 : f32 to vector<16x64xf32>
    %17 = arith.addf %16, %15 : vector<16x64xf32>
    %18 = arith.divf %16, %17 : vector<16x64xf32>
    %19 = arith.mulf %13, %18 : vector<16x64xf32>
    %20 = arith.mulf %8, %19 : vector<16x64xf32>
    %21 = arith.truncf %20 : vector<16x64xf32> to vector<16x64xbf16>
    %c0_12 = arith.constant 0 : index
    %c0_13 = arith.constant 0 : index
    %22 = vector.load %arg9[%c0_12, %c0_13] : memref<64x128xbf16, #tpu.memory_space<vmem>>, vector<64x128xbf16>
    %cst_14 = arith.constant dense<0.000000e+00> : vector<16x128xf32>
    %23 = tpu.matmul %21, %22, %cst_14 {dimension_numbers = #tpu.dot_dimension_numbers<[1], [0], [0], [1], [0, 0, 1, 1], [], []>} : vector<16x64xbf16>, vector<64x128xbf16>, vector<16x128xf32> -> vector<16x128xf32>
    %c0_i32_15 = arith.constant 0 : i32
    %24 = arith.cmpi eq, %arg1, %c0_i32_15 : i32
    %25 = arith.extui %24 : i1 to i32
    %c0_i32_16 = arith.constant 0 : i32
    %26 = arith.cmpi ne, %25, %c0_i32_16 : i32
    scf.if %26 {
      %c0_21 = arith.constant 0 : index
      %c0_22 = arith.constant 0 : index
      %33 = vector.load %arg13[%c0_21, %c0_22] : memref<16x128xf32, #tpu.memory_space<vmem>>, vector<16x128xf32>
      tpu.vector_store %arg13[%c0_21, %c0_22], %23 {strides = array<i32>} : memref<16x128xf32, #tpu.memory_space<vmem>>, vector<16x128xf32>,
    } else {
    }
    %c0_i32_17 = arith.constant 0 : i32
    %27 = arith.cmpi sgt, %arg1, %c0_i32_17 : i32
    %28 = arith.extui %27 : i1 to i32
    %c0_i32_18 = arith.constant 0 : i32
    %29 = arith.cmpi ne, %28, %c0_i32_18 : i32
    scf.if %29 {
      %c0_21 = arith.constant 0 : index
      %c0_22 = arith.constant 0 : index
      %33 = vector.load %arg13[%c0_21, %c0_22] : memref<16x128xf32, #tpu.memory_space<vmem>>, vector<16x128xf32>
      %34 = arith.addf %33, %23 : vector<16x128xf32>
      %c0_23 = arith.constant 0 : index
      %c0_24 = arith.constant 0 : index
      %35 = vector.load %arg13[%c0_23, %c0_24] : memref<16x128xf32, #tpu.memory_space<vmem>>, vector<16x128xf32>
      tpu.vector_store %arg13[%c0_23, %c0_24], %34 {strides = array<i32>} : memref<16x128xf32, #tpu.memory_space<vmem>>, vector<16x128xf32>,
    } else {
    }
    %c0_i32_19 = arith.constant 0 : i32
    %30 = arith.cmpi eq, %arg1, %c0_i32_19 : i32
    %31 = arith.extui %30 : i1 to i32
    %c0_i32_20 = arith.constant 0 : i32
    %32 = arith.cmpi ne, %31, %c0_i32_20 : i32
    scf.if %32 {
      %c0_21 = arith.constant 0 : index
      %c0_22 = arith.constant 0 : index
      %33 = vector.load %arg13[%c0_21, %c0_22] : memref<16x128xf32, #tpu.memory_space<vmem>>, vector<16x128xf32>
      %c0_23 = arith.constant 0 : index
      %c0_24 = arith.constant 0 : index
      %34 = vector.load %arg10[%c0_23, %c0_24] : memref<1x128xf32, #tpu.memory_space<vmem>>, vector<1x128xf32>
      %35 = vector.broadcast %34 : vector<1x128xf32> to vector<16x128xf32>
      %36 = arith.addf %33, %35 : vector<16x128xf32>
      %c0_25 = arith.constant 0 : index
      %c0_26 = arith.constant 0 : index
      %37 = vector.load %arg11[%c0_25, %c0_26] : memref<16x128xf32, #tpu.memory_space<vmem>>, vector<16x128xf32>
      tpu.vector_store %arg11[%c0_25, %c0_26], %36 {strides = array<i32>} : memref<16x128xf32, #tpu.memory_space<vmem>>, vector<16x128xf32>,
    } else {
    }
    return
  }
  func.func @transform_0(%arg0: i32, %arg1: i32) -> (i32, i32) {
    %c0_i32 = arith.constant 0 : i32
    %c0_i32_0 = arith.constant 0 : i32
    return %arg0, %c0_i32 : i32, i32
  }
  func.func @transform_1(%arg0: i32, %arg1: i32) -> (i32, i32) {
    %c0_i32 = arith.constant 0 : i32
    %c0_i32_0 = arith.constant 0 : i32
    %c0_i32_1 = arith.constant 0 : i32
    return %c0_i32, %c0_i32_0 : i32, i32
  }
  func.func @transform_2(%arg0: i32, %arg1: i32) -> (i32, i32) {
    %c0_i32 = arith.constant 0 : i32
    %c0_i32_0 = arith.constant 0 : i32
    %c0_i32_1 = arith.constant 0 : i32
    return %c0_i32, %c0_i32_0 : i32, i32
  }
  func.func @transform_3(%arg0: i32, %arg1: i32) -> (i32, i32) {
    %c0_i32 = arith.constant 0 : i32
    %c0_i32_0 = arith.constant 0 : i32
    return %c0_i32, %arg1 : i32, i32
  }
  func.func @transform_4(%arg0: i32, %arg1: i32) -> (i32, i32) {
    %c0_i32 = arith.constant 0 : i32
    %c0_i32_0 = arith.constant 0 : i32
    return %c0_i32, %arg1 : i32, i32
  }
  func.func @transform_5(%arg0: i32, %arg1: i32) -> (i32, i32) {
    %c0_i32 = arith.constant 0 : i32
    %c0_i32_0 = arith.constant 0 : i32
    return %c0_i32, %arg1 : i32, i32
  }
  func.func @transform_6(%arg0: i32, %arg1: i32) -> (i32, i32) {
    %c0_i32 = arith.constant 0 : i32
    %c0_i32_0 = arith.constant 0 : i32
    return %c0_i32, %arg1 : i32, i32
  }
  func.func @transform_7(%arg0: i32, %arg1: i32) -> (i32, i32) {
    %c0_i32 = arith.constant 0 : i32
    %c0_i32_0 = arith.constant 0 : i32
    return %arg1, %c0_i32 : i32, i32
  }
  func.func @transform_8(%arg0: i32, %arg1: i32) -> (i32, i32) {
    %c0_i32 = arith.constant 0 : i32
    %c0_i32_0 = arith.constant 0 : i32
    %c0_i32_1 = arith.constant 0 : i32
    return %c0_i32, %c0_i32_0 : i32, i32
  }
  func.func @transform_9(%arg0: i32, %arg1: i32) -> (i32, i32) {
    %c0_i32 = arith.constant 0 : i32
    %c0_i32_0 = arith.constant 0 : i32
    return %arg0, %c0_i32 : i32, i32
  }
}

</mosaic_0001>

<llo_original>
// kernel: tpu_custom_call.1
$region0: #{tpu_custom_call.1}
  #allocation0 [shape = 'u32[]', space=smem, size = 0x4, offset = 0x4, fixed_abs, tag = 'smem constant byte address 0x4 - core index']
  #allocation1 [shape = 'u32[144,128]{1,0:T(1,128)}', space=vmem, size = 0x12000, scoped, tag = 'internal scratch']
  #allocation2 [shape = 'bf16[16,32]{1,0:T(16,128)(2,1)}', space=vmem, size = 0x1000, scoped, tag = 'scratch operand']
  #allocation3 [shape = 'f32[16,128]{1,0:T(8,128)}', space=vmem, size = 0x2000, scoped, tag = 'scratch operand']
  %s0 = inlined_call_operand.hbm [shape: f32[16,32], index: 0, kind: input, shape index: {}]
  %s1 = inlined_call_operand.vmem [shape: f32[1,32], index: 1, kind: input, shape index: {}]
  %s2 = inlined_call_operand.vmem [shape: f32[1,32], index: 2, kind: input, shape index: {}]
  %s3 = inlined_call_operand.hbm [shape: bf16[32,64], index: 3, kind: input, shape index: {}]
  %s4 = inlined_call_operand.hbm [shape: bf16[32,64], index: 4, kind: input, shape index: {}]
  %s5 = inlined_call_operand.vmem [shape: f32[1,64], index: 5, kind: input, shape index: {}]
  %s6 = inlined_call_operand.vmem [shape: f32[1,64], index: 6, kind: input, shape index: {}]
  %s7 = inlined_call_operand.hbm [shape: bf16[64,128], index: 7, kind: input, shape index: {}]
  %s8 = inlined_call_operand.vmem [shape: f32[1,128], index: 8, kind: input, shape index: {}]
  %s9 = inlined_call_operand.hbm [shape: f32[16,128], index: 9, kind: output, shape index: {}]
  %s10 = sld [smem:[#allocation0]]
  $region78: #{tpu_custom_call.1} parent=0
    _
  %s12 = ssub.s32 1, %s10
  %s13 = scalar_select 0, %s12, %s10
  $region1: #{tpu_custom_call.1} parent=0
    #allocation4 [shape = 'u8[8192]{0}', space=vmem, size = 0x2000, scoped, tag = 'input window, operand 0, single buffered']
    #allocation5 [shape = 's32[1]{0}', space=sflag, size = 0x4, scoped, tag = 'scoped memory for tpu_custom_call.1']
    #allocation6 [shape = 's32[1]{0}', space=sflag, size = 0x4, scoped, tag = 'scoped memory for tpu_custom_call.1']
    #allocation7 [shape = 'u8[8192]{0}', space=vmem, size = 0x2000, scoped, tag = 'input window, operand 3, single buffered']
    #allocation8 [shape = 's32[1]{0}', space=sflag, size = 0x4, scoped, tag = 'scoped memory for tpu_custom_call.1']
    #allocation9 [shape = 'u8[8192]{0}', space=vmem, size = 0x2000, scoped, tag = 'input window, operand 4, single buffered']
    #allocation10 [shape = 'u8[16384]{0}', space=vmem, size = 0x4000, scoped, tag = 'input window, operand 7, single buffered']
    #allocation11 [shape = 's32[1]{0}', space=sflag, size = 0x4, scoped, tag = 'scoped memory for tpu_custom_call.1']
    #allocation12 [shape = 'u8[8192]{0}', space=vmem, size = 0x2000, scoped, tag = 'output window, operand 0, single buffered']
    %14 = vsyncpa [#allocation5], 0
    %15 = vsyncpa [#allocation8], 0
    %16 = vsyncpa [#allocation11], 0
    %17 = vsyncpa [#allocation6], 0
    // Predicated region
    $region2: #{tpu_custom_call.1} parent=1 // pred_check
      _
    $region3: #{tpu_custom_call.1} parent=1 // pred_check_branch
      %19 = sbr.rel (0) target = $region5
    $region4: #{tpu_custom_call.1} parent=1 // pred_region
      %s21 = ssub.s32 256, 256
      %22 = vsyncadd [#allocation5], %s21
      %s23 = sshll.u32 [#allocation4], 4
      %s24 = int_to_ptr.vmem [resolvable:$true] %s23
      %29 = dma.hbm_to_vmem [thread:$0]  %s0, 256, %s24, [#allocation5], 128, 128, 8
    $region5: #{tpu_custom_call.1} parent=1 // pred_fallthru
      _
    // Predicated region
    $region6: #{tpu_custom_call.1} parent=1 // pred_check
      _
    $region7: #{tpu_custom_call.1} parent=1 // pred_check_branch
      %31 = sbr.rel (0) target = $region9
    $region8: #{tpu_custom_call.1} parent=1 // pred_region
      _
    $region9: #{tpu_custom_call.1} parent=1 // pred_fallthru
      _
    // Predicated region
    $region10: #{tpu_custom_call.1} parent=1 // pred_check
      _
    $region11: #{tpu_custom_call.1} parent=1 // pred_check_branch
      %33 = sbr.rel (0) target = $region13
    $region12: #{tpu_custom_call.1} parent=1 // pred_region
      _
    $region13: #{tpu_custom_call.1} parent=1 // pred_fallthru
      _
    // Predicated region
    $region14: #{tpu_custom_call.1} parent=1 // pred_check
      _
    $region15: #{tpu_custom_call.1} parent=1 // pred_check_branch
      %35 = sbr.rel (0) target = $region17
    $region16: #{tpu_custom_call.1} parent=1 // pred_region
      %s37 = ssub.s32 256, 256
      %38 = vsyncadd [#allocation8], %s37
      %s39 = sshll.u32 [#allocation7], 4
      %s40 = int_to_ptr.vmem [resolvable:$true] %s39
      %45 = dma.hbm_to_vmem [thread:$0]  %s3, 256, %s40, [#allocation8], 64, 64, 4
    $region17: #{tpu_custom_call.1} parent=1 // pred_fallthru
      _
    // Predicated region
    $region18: #{tpu_custom_call.1} parent=1 // pred_check
      _
    $region19: #{tpu_custom_call.1} parent=1 // pred_check_branch
      %47 = sbr.rel (0) target = $region21
    $region20: #{tpu_custom_call.1} parent=1 // pred_region
      %s49 = ssub.s32 256, 256
      %50 = vsyncadd [#allocation8], %s49
      %s51 = sshll.u32 [#allocation9], 4
      %s52 = int_to_ptr.vmem [resolvable:$true] %s51
      %57 = dma.hbm_to_vmem [thread:$0]  %s4, 256, %s52, [#allocation8], 64, 64, 4
    $region21: #{tpu_custom_call.1} parent=1 // pred_fallthru
      _
    // Predicated region
    $region22: #{tpu_custom_call.1} parent=1 // pred_check
      _
    $region23: #{tpu_custom_call.1} parent=1 // pred_check_branch
      %59 = sbr.rel (0) target = $region25
    $region24: #{tpu_custom_call.1} parent=1 // pred_region
      _
    $region25: #{tpu_custom_call.1} parent=1 // pred_fallthru
      _
    // Predicated region
    $region26: #{tpu_custom_call.1} parent=1 // pred_check
      _
    $region27: #{tpu_custom_call.1} parent=1 // pred_check_branch
      %61 = sbr.rel (0) target = $region29
    $region28: #{tpu_custom_call.1} parent=1 // pred_region
      _
    $region29: #{tpu_custom_call.1} parent=1 // pred_fallthru
      _
    // Predicated region
    $region30: #{tpu_custom_call.1} parent=1 // pred_check
      _
    $region31: #{tpu_custom_call.1} parent=1 // pred_check_branch
      %63 = sbr.rel (0) target = $region33
    $region32: #{tpu_custom_call.1} parent=1 // pred_region
      %s65 = ssub.s32 512, 512
      %66 = vsyncadd [#allocation11], %s65
      %s67 = sshll.u32 [#allocation10], 4
      %s68 = int_to_ptr.vmem [resolvable:$true] %s67
      %73 = dma.hbm_to_vmem [thread:$0]  %s7, 512, %s68, [#allocation11], 64, 64, 4
    $region33: #{tpu_custom_call.1} parent=1 // pred_fallthru
      _
    // Predicated region
    $region34: #{tpu_custom_call.1} parent=1 // pred_check
      _
    $region35: #{tpu_custom_call.1} parent=1 // pred_check_branch
      %75 = sbr.rel (0) target = $region37
    $region36: #{tpu_custom_call.1} parent=1 // pred_region
      _
    $region37: #{tpu_custom_call.1} parent=1 // pred_fallthru
      _
    // Predicated region
    $region38: #{tpu_custom_call.1} parent=1 // pred_check
      _
    $region39: #{tpu_custom_call.1} parent=1 // pred_check_branch
      %77 = sbr.rel (0) target = $region41
    $region40: #{tpu_custom_call.1} parent=1 // pred_region
      %78 = dma.done [#allocation5], 256
    $region41: #{tpu_custom_call.1} parent=1 // pred_fallthru
      _
    // Predicated region
    $region42: #{tpu_custom_call.1} parent=1 // pred_check
      _
    $region43: #{tpu_custom_call.1} parent=1 // pred_check_branch
      %80 = sbr.rel (0) target = $region45
    $region44: #{tpu_custom_call.1} parent=1 // pred_region
      %81 = dma.done [#allocation8], 256
    $region45: #{tpu_custom_call.1} parent=1 // pred_fallthru
      _
    // Predicated region
    $region46: #{tpu_custom_call.1} parent=1 // pred_check
      _
    $region47: #{tpu_custom_call.1} parent=1 // pred_check_branch
      %83 = sbr.rel (0) target = $region49
    $region48: #{tpu_custom_call.1} parent=1 // pred_region
      %84 = dma.done [#allocation8], 256
    $region49: #{tpu_custom_call.1} parent=1 // pred_fallthru
      _
    // Predicated region
    $region50: #{tpu_custom_call.1} parent=1 // pred_check
      _
    $region51: #{tpu_custom_call.1} parent=1 // pred_check_branch
      %86 = sbr.rel (0) target = $region53
    $region52: #{tpu_custom_call.1} parent=1 // pred_region
      %87 = dma.done [#allocation11], 512
    $region53: #{tpu_custom_call.1} parent=1 // pred_fallthru
      _
    %p89 = scmp.eq.s32.totalorder 0, 0
    // Predicated region
    $region54: #{tpu_custom_call.1} parent=1 // pred_check
      %p90 = pneg %p89
    $region55: #{tpu_custom_call.1} parent=1 // pred_check_branch
      %92 = sbr.rel (%p90) target = $region57
    $region56: #{tpu_custom_call.1} parent=1 // pred_region
      %v93 = vld [vmem:[#allocation4] sm:$0xff]
      %v94 = vld [vmem:[#allocation4 + $0x8] sm:$0xff]
      %vm95 = vcmask 261120
      %v96 = vsel %vm95, %v93, 0.0
      %97 = vadd.xlane.f32.xlu0 %v96
      %v98 = vpop.xlane.xlu0 %97
      %v99 = vsel %vm95, %v94, 0.0
      %100 = vadd.xlane.f32.xlu0 %v99
      %v101 = vpop.xlane.xlu0 %100
      %v102 = vrcp.pop 32.0
      %v103 = vmul.f32 %v98, %v102
      %v104 = vmul.f32 %v101, %v102
      %v105 = vsub.f32 %v93, %v103
      %v106 = vsub.f32 %v94, %v104
      %v107 = vmul.f32 %v105, %v105
      %v108 = vmul.f32 %v106, %v106
      %v109 = vsel %vm95, %v107, 0.0
      %110 = vadd.xlane.f32.xlu0 %v109
      %v111 = vpop.xlane.xlu0 %110
      %v112 = vsel %vm95, %v108, 0.0
      %113 = vadd.xlane.f32.xlu0 %v112
      %v114 = vpop.xlane.xlu0 %113
      %v115 = vmul.f32 %v111, %v102
      %v116 = vmul.f32 %v114, %v102
      %v117 = vadd.f32 %v115, 1e-05
      %v118 = vadd.f32 %v116, 1e-05
      %v119 = vrsqrt.pop %v117
      %v120 = vrsqrt.pop %v118
      %v121 = vmul.f32 %v105, %v119
      %v122 = vmul.f32 %v106, %v120
      %v123 = vld [vmem:[%s1] sm:$0x1]
      %v125 = vlaneseq
      %v126 = vshrl.u32 %v125, 7
      %v127 = vsub.s32 0, %v126
      %v128 = vrot.slane %v123, %v127
      %v130 = vmul.f32 %v121, %v128
      %v131 = vmul.f32 %v122, %v128
      %v132 = vld [vmem:[%s2] sm:$0x1]
      %v134 = vlaneseq
      %v135 = vshrl.u32 %v134, 7
      %v136 = vsub.s32 0, %v135
      %v137 = vrot.slane %v132, %v136
      %v139 = vadd.f32 %v130, %v137
      %v140 = vadd.f32 %v131, %v137
      %v141 = vpack.c.bf16 %v140, %v139
      %142 = vst.msk [vmem:[#allocation2] sm:$0xff] %vm95, %v141
    $region57: #{tpu_custom_call.1} parent=1 // pred_fallthru
      _
    %v143 = vld [vmem:[#allocation2] sm:$0xff]
    %v144 = vld [vmem:[#allocation7] sm:$0xf]
    %v145 = vld [vmem:[#allocation7 + $0x4] sm:$0xf]
    %v146 = vld [vmem:[#allocation7 + $0x8] sm:$0xf]
    %v147 = vld [vmem:[#allocation7 + $0xc] sm:$0xf]
    %v148 = vld [vmem:[%s5] sm:$0x1]
    %v150 = vlaneseq
    %v151 = vshrl.u32 %v150, 7
    %v152 = vsub.s32 0, %v151
    %v153 = vrot.slane %v148, %v152
    %v159 = vunpack.c.l.b16 %v144
    %v160 = vunpack.c.l.b16 %v145
    %v161 = vunpack.c.l.b16 %v146
    %v162 = vunpack.c.l.b16 %v147
    %v163 = vpack.c.b16 %v160, %v159
    %v164 = vpack.c.b16 %v162, %v161
    %vm167 = vcmask 261120
    %v169 = vsel %vm167, %v143, 0
    %171 = vmatprep.subr.bf16.mxu0 0
    %172 = vmatpush1.bf16.msra.mxu0 %v163
    %173 = vmatprep.subr.bf16.mxu0 0
    %174 = vmatpush1.bf16.msra.mxu0 %v164
    %175 = vmatprep.subr.bf16.mxu0 0
    %176 = vmatpush1.bf16.msra.mxu0 0
    %177 = vmatprep.subr.bf16.mxu0 0
    %178 = vmatpush1.bf16.msra.mxu0 0
    %179 = vmatprep.subr.bf16.mxu0 0
    %180 = vmatpush1.bf16.msra.mxu0 0
    %181 = vmatprep.subr.bf16.mxu0 0
    %182 = vmatpush1.bf16.msra.mxu0 0
    %183 = vmatprep.subr.bf16.mxu0 0
    %184 = vmatpush1.bf16.msra.mxu0 0
    %185 = vmatprep.subr.bf16.mxu0 0
    %186 = vmatpush1.bf16.msra.mxu0 0
    %187 = vmatprep.subr.bf16.mxu0 0
    %188 = vmatpush1.bf16.msra.mxu0 0
    %189 = vmatprep.subr.bf16.mxu0 0
    %190 = vmatpush1.bf16.msra.mxu0 0
    %191 = vmatprep.subr.bf16.mxu0 0
    %192 = vmatpush1.bf16.msra.mxu0 0
    %193 = vmatprep.subr.bf16.mxu0 0
    %194 = vmatpush1.bf16.msra.mxu0 0
    %195 = vmatprep.subr.bf16.mxu0 0
    %196 = vmatpush1.bf16.msra.mxu0 0
    %197 = vmatprep.subr.bf16.mxu0 0
    %198 = vmatpush1.bf16.msra.mxu0 0
    %199 = vmatprep.subr.bf16.mxu0 0
    %200 = vmatpush1.bf16.msra.mxu0 0
    %201 = vmatprep.subr.bf16.mxu0 0
    %202 = vmatpush1.bf16.msra.mxu0 0
    %203 = vmatprep.mubr.bf16.mxu0 0
    %204 = vmatmul.mubr.bf16.gmra.mrb[0].mxu0 %v169
    %v205 = vpop.f32.mrb[0].mxu0
    %v206 = vadd.f32 %v153, %v205
    %v207 = vpop.f32.mrb[0].mxu0
    %v208 = vpop.f32.mrb[0].mxu0
    %v209 = vadd.f32 %v153, %v208
    %v210 = vpop.f32.mrb[0].mxu0
    %211 = vdwg.mxu0
    %v212 = vld [vmem:[#allocation9] sm:$0xf]
    %v213 = vld [vmem:[#allocation9 + $0x4] sm:$0xf]
    %v214 = vld [vmem:[#allocation9 + $0x8] sm:$0xf]
    %v215 = vld [vmem:[#allocation9 + $0xc] sm:$0xf]
    %v216 = vld [vmem:[%s6] sm:$0x1]
    %v218 = vlaneseq
    %v219 = vshrl.u32 %v218, 7
    %v220 = vsub.s32 0, %v219
    %v221 = vrot.slane %v216, %v220
    %v227 = vunpack.c.l.b16 %v212
    %v228 = vunpack.c.l.b16 %v213
    %v229 = vunpack.c.l.b16 %v214
    %v230 = vunpack.c.l.b16 %v215
    %v231 = vpack.c.b16 %v228, %v227
    %v232 = vpack.c.b16 %v230, %v229
    %235 = vmatprep.subr.bf16.mxu0 0
    %236 = vmatpush1.bf16.msra.mxu0 %v231
    %237 = vmatprep.subr.bf16.mxu0 0
    %238 = vmatpush1.bf16.msra.mxu0 %v232
    %239 = vmatprep.subr.bf16.mxu0 0
    %240 = vmatpush1.bf16.msra.mxu0 0
    %241 = vmatprep.subr.bf16.mxu0 0
    %242 = vmatpush1.bf16.msra.mxu0 0
    %243 = vmatprep.subr.bf16.mxu0 0
    %244 = vmatpush1.bf16.msra.mxu0 0
    %245 = vmatprep.subr.bf16.mxu0 0
    %246 = vmatpush1.bf16.msra.mxu0 0
    %247 = vmatprep.subr.bf16.mxu0 0
    %248 = vmatpush1.bf16.msra.mxu0 0
    %249 = vmatprep.subr.bf16.mxu0 0
    %250 = vmatpush1.bf16.msra.mxu0 0
    %251 = vmatprep.subr.bf16.mxu0 0
    %252 = vmatpush1.bf16.msra.mxu0 0
    %253 = vmatprep.subr.bf16.mxu0 0
    %254 = vmatpush1.bf16.msra.mxu0 0
    %255 = vmatprep.subr.bf16.mxu0 0
    %256 = vmatpush1.bf16.msra.mxu0 0
    %257 = vmatprep.subr.bf16.mxu0 0
    %258 = vmatpush1.bf16.msra.mxu0 0
    %259 = vmatprep.subr.bf16.mxu0 0
    %260 = vmatpush1.bf16.msra.mxu0 0
    %261 = vmatprep.subr.bf16.mxu0 0
    %262 = vmatpush1.bf16.msra.mxu0 0
    %263 = vmatprep.subr.bf16.mxu0 0
    %264 = vmatpush1.bf16.msra.mxu0 0
    %265 = vmatprep.subr.bf16.mxu0 0
    %266 = vmatpush1.bf16.msra.mxu0 0
    %267 = vmatprep.mubr.bf16.mxu0 0
    %268 = vmatmul.mubr.bf16.gmra.mrb[0].mxu0 %v169
    %v269 = vpop.f32.mrb[0].mxu0
    %v270 = vadd.f32 %v221, %v269
    %v271 = vpop.f32.mrb[0].mxu0
    %v272 = vpop.f32.mrb[0].mxu0
    %v273 = vadd.f32 %v221, %v272
    %v274 = vpop.f32.mrb[0].mxu0
    %275 = vdwg.mxu0
    %v276 = vxor.u32 %v270, 2147483648
    %v277 = vxor.u32 %v273, 2147483648
    %v278 = vmul.f32 %v276, 1.442695
    %v279 = vpow.pop %v278
    %v280 = vmul.f32 %v277, 1.442695
    %v281 = vpow.pop %v280
    %v282 = vadd.f32 %v279, 1.0
    %v283 = vadd.f32 %v281, 1.0
    %v284 = vrcp.pop %v282
    %v285 = vmul.f32 1.0, %v284
    %v286 = vrcp.pop %v283
    %v287 = vmul.f32 1.0, %v286
    %v288 = vmul.f32 %v270, %v285
    %v289 = vmul.f32 %v273, %v287
    %v290 = vmul.f32 %v206, %v288
    %v291 = vmul.f32 %v209, %v289
    %v292 = vpack.c.bf16 %v291, %v290
    %v293 = vld [vmem:[#allocation10] sm:$0xf]
    %v294 = vld [vmem:[#allocation10 + $0x4] sm:$0xf]
    %v295 = vld [vmem:[#allocation10 + $0x8] sm:$0xf]
    %v296 = vld [vmem:[#allocation10 + $0xc] sm:$0xf]
    %v297 = vld [vmem:[#allocation10 + $0x10] sm:$0xf]
    %v298 = vld [vmem:[#allocation10 + $0x14] sm:$0xf]
    %v299 = vld [vmem:[#allocation10 + $0x18] sm:$0xf]
    %v300 = vld [vmem:[#allocation10 + $0x1c] sm:$0xf]
    %v309 = vunpack.c.l.b16 %v293
    %v310 = vunpack.c.l.b16 %v294
    %v311 = vunpack.c.l.b16 %v295
    %v312 = vunpack.c.l.b16 %v296
    %v313 = vunpack.c.l.b16 %v297
    %v314 = vunpack.c.l.b16 %v298
    %v315 = vunpack.c.l.b16 %v299
    %v316 = vunpack.c.l.b16 %v300
    %v317 = vpack.c.b16 %v310, %v309
    %v318 = vpack.c.b16 %v312, %v311
    %v319 = vpack.c.b16 %v314, %v313
    %v320 = vpack.c.b16 %v316, %v315
    %vm325 = vcmask 523264
    %v327 = vsel %vm325, %v292, 0
    %329 = vmatprep.subr.bf16.mxu0 0
    %330 = vmatpush1.bf16.msra.mxu0 %v317
    %331 = vmatprep.subr.bf16.mxu0 0
    %332 = vmatpush1.bf16.msra.mxu0 %v318
    %333 = vmatprep.subr.bf16.mxu0 0
    %334 = vmatpush1.bf16.msra.mxu0 %v319
    %335 = vmatprep.subr.bf16.mxu0 0
    %336 = vmatpush1.bf16.msra.mxu0 %v320
    %337 = vmatprep.subr.bf16.mxu0 0
    %338 = vmatpush1.bf16.msra.mxu0 0
    %339 = vmatprep.subr.bf16.mxu0 0
    %340 = vmatpush1.bf16.msra.mxu0 0
    %341 = vmatprep.subr.bf16.mxu0 0
    %342 = vmatpush1.bf16.msra.mxu0 0
    %343 = vmatprep.subr.bf16.mxu0 0
    %344 = vmatpush1.bf16.msra.mxu0 0
    %345 = vmatprep.subr.bf16.mxu0 0
    %346 = vmatpush1.bf16.msra.mxu0 0
    %347 = vmatprep.subr.bf16.mxu0 0
    %348 = vmatpush1.bf16.msra.mxu0 0
    %349 = vmatprep.subr.bf16.mxu0 0
    %350 = vmatpush1.bf16.msra.mxu0 0
    %351 = vmatprep.subr.bf16.mxu0 0
    %352 = vmatpush1.bf16.msra.mxu0 0
    %353 = vmatprep.subr.bf16.mxu0 0
    %354 = vmatpush1.bf16.msra.mxu0 0
    %355 = vmatprep.subr.bf16.mxu0 0
    %356 = vmatpush1.bf16.msra.mxu0 0
    %357 = vmatprep.subr.bf16.mxu0 0
    %358 = vmatpush1.bf16.msra.mxu0 0
    %359 = vmatprep.subr.bf16.mxu0 0
    %360 = vmatpush1.bf16.msra.mxu0 0
    %361 = vmatprep.mubr.bf16.mxu0 0
    %362 = vmatmul.mubr.bf16.gmra.mrb[0].mxu0 %v327
    %v363 = vpop.f32.mrb[0].mxu0
    %v364 = vadd.f32 0.0, %v363
    %v365 = vpop.f32.mrb[0].mxu0
    %v366 = vpop.f32.mrb[0].mxu0
    %v367 = vadd.f32 0.0, %v366
    %v368 = vpop.f32.mrb[0].mxu0
    %369 = vdwg.mxu0
    // Predicated region
    $region58: #{tpu_custom_call.1} parent=1 // pred_check
      %p370 = pneg %p89
    $region59: #{tpu_custom_call.1} parent=1 // pred_check_branch
      %372 = sbr.rel (%p370) target = $region61
    $region60: #{tpu_custom_call.1} parent=1 // pred_region
      %373 = vst [vmem:[#allocation3] sm:$0xff] %v364
      %374 = vst [vmem:[#allocation3 + $0x8] sm:$0xff] %v367
    $region61: #{tpu_custom_call.1} parent=1 // pred_fallthru
      _
    %p375 = scmp.gt.s32.totalorder 0, 0
    // Predicated region
    $region62: #{tpu_custom_call.1} parent=1 // pred_check
      %p376 = pneg %p375
    $region63: #{tpu_custom_call.1} parent=1 // pred_check_branch
      %378 = sbr.rel (%p376) target = $region65
    $region64: #{tpu_custom_call.1} parent=1 // pred_region
      %v379 = vld [vmem:[#allocation3] sm:$0xff]
      %v380 = vld [vmem:[#allocation3 + $0x8] sm:$0xff]
      %v381 = vadd.f32 %v379, %v364
      %v382 = vadd.f32 %v380, %v367
      %383 = vst [vmem:[#allocation3] sm:$0xff] %v381
      %384 = vst [vmem:[#allocation3 + $0x8] sm:$0xff] %v382
    $region65: #{tpu_custom_call.1} parent=1 // pred_fallthru
      _
    // Predicated region
    $region66: #{tpu_custom_call.1} parent=1 // pred_check
      %p385 = pneg %p89
    $region67: #{tpu_custom_call.1} parent=1 // pred_check_branch
      %387 = sbr.rel (%p385) target = $region69
    $region68: #{tpu_custom_call.1} parent=1 // pred_region
      %v388 = vld [vmem:[#allocation3] sm:$0xff]
      %v389 = vld [vmem:[#allocation3 + $0x8] sm:$0xff]
      %v390 = vld [vmem:[%s8] sm:$0x1]
      %v392 = vlaneseq
      %v393 = vshrl.u32 %v392, 7
      %v394 = vsub.s32 0, %v393
      %v395 = vrot.slane %v390, %v394
      %v397 = vadd.f32 %v388, %v395
      %v398 = vadd.f32 %v389, %v395
      %399 = vst [vmem:[#allocation12] sm:$0xff] %v397
      %400 = vst [vmem:[#allocation12 + $0x8] sm:$0xff] %v398
    $region69: #{tpu_custom_call.1} parent=1 // pred_fallthru
      _
    // Predicated region
    $region70: #{tpu_custom_call.1} parent=1 // pred_check
      _
    $region71: #{tpu_custom_call.1} parent=1 // pred_check_branch
      %402 = sbr.rel (0) target = $region73
    $region72: #{tpu_custom_call.1} parent=1 // pred_region
      %s404 = ssub.s32 256, 256
      %405 = vsyncadd [#allocation6], %s404
      %s406 = sshll.u32 [#allocation12], 4
      %s407 = int_to_ptr.vmem [resolvable:$true] %s406
      %412 = dma.vmem_to_hbm [thread:$0]  %s407, 256, %s9, [#allocation6], 128, 128, 8
    $region73: #{tpu_custom_call.1} parent=1 // pred_fallthru
      _
    // Predicated region
    $region74: #{tpu_custom_call.1} parent=1 // pred_check
      _
    $region75: #{tpu_custom_call.1} parent=1 // pred_check_branch
      %414 = sbr.rel (0) target = $region77
    $region76: #{tpu_custom_call.1} parent=1 // pred_region
      %415 = dma.done [#allocation6], 256
    $region77: #{tpu_custom_call.1} parent=1 // pred_fallthru
      _
    %416 = vsyncpa [#allocation5], 1
    %417 = vsyncpa [#allocation8], 1
    %418 = vsyncpa [#allocation11], 1
    %419 = vsyncpa [#allocation6], 1

</llo_original>
